<compile_context>
chip_gen: v5e
topology: v5e:2x2
jax: 0.10.0
libtpu: 0.0.40
codegen_flags: <defaults>
</compile_context>

<pallas_src>
import functools

import jax
import jax.numpy as jnp
from jax.experimental import pallas as pl
from jax.experimental.pallas import tpu as pltpu

NEG_SLOPE = 0.01  # nn.LeakyReLU() default negative_slope


def _leaky_relu(x):
    return jnp.where(x > 0, x, NEG_SLOPE * x)


def _round_up(n, m):
    return ((n + m - 1) // m) * m


def titanic_mlp_kernel(xt_ref, w1_ref, b1_ref, w2_ref, b2_ref, w3_ref, ot_ref):
    # xt_ref: (8, TB) bf16 -- batch on the lane axis (feature-major layout).
    xt = xt_ref[...]

    # linear1: MXU dot, bf16 inputs / f32 accumulation; bias + LeakyReLU in f32.
    h1 = jnp.dot(w1_ref[...], xt, preferred_element_type=jnp.float32)  # (H1, TB)
    h1 = _leaky_relu(h1 + b1_ref[...])          # (H1, 1) bias broadcasts over lanes
    # TODO(synk): training-mode Dropout(p=0.01) (pltpu.prng_seed +
    # pltpu.prng_random_bits mask between the dots) not implemented;
    # eval/inference-mode identity only, matching the f32 reference.

    # linear2: cast the activation to bf16 only at the MXU input; math stays f32.
    h2 = jnp.dot(w2_ref[...], h1.astype(w2_ref.dtype),
                 preferred_element_type=jnp.float32)                  # (H2, TB)
    h2 = _leaky_relu(h2 + b2_ref[...])

    # linear3 (no bias): out[b] = sum_k w3[k] * h2[k, b].
    # VPU multiply + sublane (XLU) reduce -> lane-dense (1, TB) result row.
    ot_ref[...] = jnp.sum(h2 * w3_ref[...], axis=0, keepdims=True)


def prepare_params(w1, b1, w2, b2, w3):
    """One-time prep: MXU weights in bf16, biases / final layer as f32 columns."""
    H1 = w1.shape[0]
    H2 = w2.shape[0]
    return (
        jnp.asarray(w1, jnp.bfloat16),            # (H1, 8)
        jnp.asarray(b1, jnp.float32).reshape(H1, 1),
        jnp.asarray(w2, jnp.bfloat16),            # (H2, H1)
        jnp.asarray(b2, jnp.float32).reshape(H2, 1),
        jnp.asarray(w3, jnp.float32).reshape(H2, 1),
    )


@functools.partial(jax.jit, static_argnames=("tb_target",))
def titanic_forward(x, params, *, tb_target=8192):
    """Fused forward pass.

    x: (B, 8) float32; params from prepare_params(). Returns (B, 1) float32.
    """
    w1, b1c, w2, b2c, w3c = params
    B, F = x.shape
    H1 = w1.shape[0]
    H2 = w2.shape[0]

    # Batch tile: large to amortize per-grid-step overhead, capped at half the
    # batch (rounded to 128 lanes) so the grid has >= 2 steps whenever possible
    # (v7x: shard batch grid across both TensorCores). VMEM use at TB=8192 is
    # well under 1 MiB of streamed tiles -> not the binding constraint anywhere.
    tb = min(tb_target, max(128, _round_up((B + 1) // 2, 128)))
    b_pad = _round_up(B, tb)
    grid = (b_pad // tb,)

    # Feature-major bf16 stream: one transpose + one pad (no zeros+set passes).
    xt = jnp.pad(x.astype(jnp.bfloat16).T, ((0, 0), (0, b_pad - B)))

    out_t = pl.pallas_call(
        titanic_mlp_kernel,
        out_shape=jax.ShapeDtypeStruct((1, b_pad), jnp.float32),
        grid=grid,
        in_specs=[
            pl.BlockSpec((F, tb), lambda i: (0, i)),        # x: streamed per tile
            pl.BlockSpec((H1, F), lambda i: (0, 0)),        # weights / biases:
            pl.BlockSpec((H1, 1), lambda i: (0, 0)),        #  constant block idx
            pl.BlockSpec((H2, H1), lambda i: (0, 0)),       #  -> VMEM-resident,
            pl.BlockSpec((H2, 1), lambda i: (0, 0)),        #     no refetch
            pl.BlockSpec((H2, 1), lambda i: (0, 0)),
        ],
        out_specs=pl.BlockSpec((1, tb), lambda i: (0, i)),  # lane-dense output row
        compiler_params=pltpu.CompilerParams(
            dimension_semantics=("parallel",),              # batch split across TCs (v7x)
        ),
    )(xt, w1, b1c, w2, b2c, w3c)

    return out_t[0, :B].reshape(B, 1)


def init_linear_params(key, fan_in, fan_out, bias=True):
    """PyTorch nn.Linear default init: U(-1/sqrt(fan_in), 1/sqrt(fan_in)); W is (out, in)."""
    kw, kb = jax.random.split(key)
    bound = 1.0 / jnp.sqrt(jnp.float32(fan_in))
    w = jax.random.uniform(kw, (fan_out, fan_in), jnp.float32, -bound, bound)
    b = (jax.random.uniform(kb, (fan_out,), jnp.float32, -bound, bound)
         if bias else None)
    return w, b


def reference_forward(x, w1, b1, w2, b2, w3):
    h1 = _leaky_relu(x @ w1.T + b1)
    h2 = _leaky_relu(h1 @ w2.T + b2)
    return h2 @ w3.T


if __name__ == "__main__":
    B = 8                 # small demo batch (kernel itself targets large B)
    NUM_HIDDEN_1 = 32
    NUM_HIDDEN_2 = 16

    key = jax.random.PRNGKey(0)
    kx, k1, k2, k3 = jax.random.split(key, 4)

    x = jax.random.normal(kx, (B, 8), jnp.float32)

    w1, b1 = init_linear_params(k1, 8, NUM_HIDDEN_1)
    w2, b2 = init_linear_params(k2, NUM_HIDDEN_1, NUM_HIDDEN_2)
    w3, _ = init_linear_params(k3, NUM_HIDDEN_2, 1, bias=False)

    params = prepare_params(w1, b1, w2, b2, w3)

    out = titanic_forward(x, params)
    out = jax.block_until_ready(out)

    ref = reference_forward(x, w1, b1, w2, b2, w3)
    assert out.shape == (B, 1)
    # bf16 streaming into the MXU -> loosened tolerance vs. the f32 reference.
    assert jnp.allclose(out, ref, atol=3e-2, rtol=3e-2), float(
        jnp.max(jnp.abs(out - ref)))

    print("KERNEL_OK")
</pallas_src>

<mosaic_0001>
module attributes {stable_mosaic.version = 11 : i64} {
  func.func @titanic_mlp_kernel(%arg0: i32, %arg1: memref<8x128xbf16, #tpu.memory_space<vmem>>, %arg2: memref<32x8xbf16, #tpu.memory_space<vmem>>, %arg3: memref<32x1xf32, #tpu.memory_space<vmem>>, %arg4: memref<16x32xbf16, #tpu.memory_space<vmem>>, %arg5: memref<16x1xf32, #tpu.memory_space<vmem>>, %arg6: memref<16x1xf32, #tpu.memory_space<vmem>>, %arg7: memref<1x128xf32, #tpu.memory_space<vmem>>) attributes {dimension_semantics = [#tpu.dimension_semantics<parallel>], iteration_bounds = array<i64: 1>, scalar_prefetch = 0 : i64, scratch_operands = 0 : i64, tpu.core_type = #tpu.core_type<tc>, window_params = [{transform_indices = @transform_0, window_bounds = array<i64: 8, 128>}, {pipeline_mode = #tpu.pipeline_mode<synchronous>, transform_indices = @transform_1, window_bounds = array<i64: 32, 8>}, {pipeline_mode = #tpu.pipeline_mode<synchronous>, transform_indices = @transform_2, window_bounds = array<i64: 32, 1>}, {pipeline_mode = #tpu.pipeline_mode<synchronous>, transform_indices = @transform_3, window_bounds = array<i64: 16, 32>}, {pipeline_mode = #tpu.pipeline_mode<synchronous>, transform_indices = @transform_4, window_bounds = array<i64: 16, 1>}, {pipeline_mode = #tpu.pipeline_mode<synchronous>, transform_indices = @transform_5, window_bounds = array<i64: 16, 1>}, {transform_indices = @transform_6, window_bounds = array<i64: 1, 128>}]} {
    %c0 = arith.constant 0 : index
    %c0_0 = arith.constant 0 : index
    %0 = vector.load %arg1[%c0, %c0_0] : memref<8x128xbf16, #tpu.memory_space<vmem>>, vector<8x128xbf16>
    %c0_1 = arith.constant 0 : index
    %c0_2 = arith.constant 0 : index
    %1 = vector.load %arg2[%c0_1, %c0_2] : memref<32x8xbf16, #tpu.memory_space<vmem>>, vector<32x8xbf16>
    %cst = arith.constant dense<0.000000e+00> : vector<32x128xf32>
    %2 = tpu.matmul %1, %0, %cst {dimension_numbers = #tpu.dot_dimension_numbers<[1], [0], [0], [1], [0, 0, 1, 1], [], []>} : vector<32x8xbf16>, vector<8x128xbf16>, vector<32x128xf32> -> vector<32x128xf32>
    %c0_3 = arith.constant 0 : index
    %c0_4 = arith.constant 0 : index
    %3 = vector.load %arg3[%c0_3, %c0_4] : memref<32x1xf32, #tpu.memory_space<vmem>>, vector<32x1xf32>
    %4 = vector.broadcast %3 : vector<32x1xf32> to vector<32x128xf32>
    %5 = arith.addf %2, %4 : vector<32x128xf32>
    %cst_5 = arith.constant 0.000000e+00 : f32
    %6 = vector.broadcast %cst_5 : f32 to vector<32x128xf32>
    %7 = arith.cmpf ogt, %5, %6 : vector<32x128xf32>
    %cst_6 = arith.constant 0.00999999977 : f32
    %8 = vector.broadcast %cst_6 : f32 to vector<32x128xf32>
    %9 = arith.mulf %8, %5 : vector<32x128xf32>
    %10 = arith.select %7, %5, %9 : vector<32x128xi1>, vector<32x128xf32>
    %c0_7 = arith.constant 0 : index
    %c0_8 = arith.constant 0 : index
    %11 = vector.load %arg4[%c0_7, %c0_8] : memref<16x32xbf16, #tpu.memory_space<vmem>>, vector<16x32xbf16>
    %12 = arith.truncf %10 : vector<32x128xf32> to vector<32x128xbf16>
    %cst_9 = arith.constant dense<0.000000e+00> : vector<16x128xf32>
    %13 = tpu.matmul %11, %12, %cst_9 {dimension_numbers = #tpu.dot_dimension_numbers<[1], [0], [0], [1], [0, 0, 1, 1], [], []>} : vector<16x32xbf16>, vector<32x128xbf16>, vector<16x128xf32> -> vector<16x128xf32>
    %c0_10 = arith.constant 0 : index
    %c0_11 = arith.constant 0 : index
    %14 = vector.load %arg5[%c0_10, %c0_11] : memref<16x1xf32, #tpu.memory_space<vmem>>, vector<16x1xf32>
    %15 = vector.broadcast %14 : vector<16x1xf32> to vector<16x128xf32>
    %16 = arith.addf %13, %15 : vector<16x128xf32>
    %cst_12 = arith.constant 0.000000e+00 : f32
    %17 = vector.broadcast %cst_12 : f32 to vector<16x128xf32>
    %18 = arith.cmpf ogt, %16, %17 : vector<16x128xf32>
    %cst_13 = arith.constant 0.00999999977 : f32
    %19 = vector.broadcast %cst_13 : f32 to vector<16x128xf32>
    %20 = arith.mulf %19, %16 : vector<16x128xf32>
    %21 = arith.select %18, %16, %20 : vector<16x128xi1>, vector<16x128xf32>
    %c0_14 = arith.constant 0 : index
    %c0_15 = arith.constant 0 : index
    %22 = vector.load %arg6[%c0_14, %c0_15] : memref<16x1xf32, #tpu.memory_space<vmem>>, vector<16x1xf32>
    %23 = vector.broadcast %22 : vector<16x1xf32> to vector<16x128xf32>
    %24 = arith.mulf %21, %23 : vector<16x128xf32>
    %cst_16 = arith.constant dense<0.000000e+00> : vector<128xf32>
    %25 = vector.multi_reduction <add>, %24, %cst_16 [0] : vector<16x128xf32> to vector<128xf32>
    %26 = vector.shape_cast %25 : vector<128xf32> to vector<1x128xf32>
    %c0_17 = arith.constant 0 : index
    %c0_18 = arith.constant 0 : index
    %27 = vector.load %arg7[%c0_17, %c0_18] : memref<1x128xf32, #tpu.memory_space<vmem>>, vector<1x128xf32>
    tpu.vector_store %arg7[%c0_17, %c0_18], %26 {strides = array<i32>} : memref<1x128xf32, #tpu.memory_space<vmem>>, vector<1x128xf32>,
    return
  }
  func.func @transform_0(%arg0: i32) -> (i32, i32) {
    %c0_i32 = arith.constant 0 : i32
    %c0_i32_0 = arith.constant 0 : i32
    return %c0_i32, %arg0 : i32, i32
  }
  func.func @transform_1(%arg0: i32) -> (i32, i32) {
    %c0_i32 = arith.constant 0 : i32
    %c0_i32_0 = arith.constant 0 : i32
    %c0_i32_1 = arith.constant 0 : i32
    return %c0_i32, %c0_i32_0 : i32, i32
  }
  func.func @transform_2(%arg0: i32) -> (i32, i32) {
    %c0_i32 = arith.constant 0 : i32
    %c0_i32_0 = arith.constant 0 : i32
    %c0_i32_1 = arith.constant 0 : i32
    return %c0_i32, %c0_i32_0 : i32, i32
  }
  func.func @transform_3(%arg0: i32) -> (i32, i32) {
    %c0_i32 = arith.constant 0 : i32
    %c0_i32_0 = arith.constant 0 : i32
    %c0_i32_1 = arith.constant 0 : i32
    return %c0_i32, %c0_i32_0 : i32, i32
  }
  func.func @transform_4(%arg0: i32) -> (i32, i32) {
    %c0_i32 = arith.constant 0 : i32
    %c0_i32_0 = arith.constant 0 : i32
    %c0_i32_1 = arith.constant 0 : i32
    return %c0_i32, %c0_i32_0 : i32, i32
  }
  func.func @transform_5(%arg0: i32) -> (i32, i32) {
    %c0_i32 = arith.constant 0 : i32
    %c0_i32_0 = arith.constant 0 : i32
    %c0_i32_1 = arith.constant 0 : i32
    return %c0_i32, %c0_i32_0 : i32, i32
  }
  func.func @transform_6(%arg0: i32) -> (i32, i32) {
    %c0_i32 = arith.constant 0 : i32
    %c0_i32_0 = arith.constant 0 : i32
    return %c0_i32, %arg0 : i32, i32
  }
}

</mosaic_0001>

<llo_original>
// kernel: titanic_forward.1
$region0: #{titanic_forward.1}
  #allocation0 [shape = 'u32[]', space=smem, size = 0x4, offset = 0x4, fixed_abs, tag = 'smem constant byte address 0x4 - core index']
  #allocation1 [shape = 'u32[72,128]{1,0:T(1,128)}', space=vmem, size = 0x9000, scoped, tag = 'internal scratch']
  %s0 = inlined_call_operand.vmem [shape: bf16[8,128], index: 0, kind: input, shape index: {}]
  %s1 = inlined_call_operand.vmem [shape: bf16[32,8], index: 1, kind: input, shape index: {}]
  %s2 = inlined_call_operand.vmem [shape: f32[32,1], index: 2, kind: input, shape index: {}]
  %s3 = inlined_call_operand.vmem [shape: bf16[16,32], index: 3, kind: input, shape index: {}]
  %s4 = inlined_call_operand.vmem [shape: f32[16,1], index: 4, kind: input, shape index: {}]
  %s5 = inlined_call_operand.vmem [shape: f32[16,1], index: 5, kind: input, shape index: {}]
  %s6 = inlined_call_operand.vmem [shape: f32[1,128], index: 6, kind: output, shape index: {}]
  %s7 = sld [smem:[#allocation0]]
  $region34: #{titanic_forward.1} parent=0
    _
  %s9 = ssub.s32 1, %s7
  %s10 = scalar_select 0, %s9, %s7
  // Predicated region
  $region2: #{titanic_forward.1} parent=0 // pred_check
    _
  $region3: #{titanic_forward.1} parent=0 // pred_check_branch
    %12 = sbr.rel (0) target = $region5
  $region4: #{titanic_forward.1} parent=0 // pred_region
    _
  $region5: #{titanic_forward.1} parent=0 // pred_fallthru
    _
  // Predicated region
  $region6: #{titanic_forward.1} parent=0 // pred_check
    _
  $region7: #{titanic_forward.1} parent=0 // pred_check_branch
    %14 = sbr.rel (0) target = $region9
  $region8: #{titanic_forward.1} parent=0 // pred_region
    _
  $region9: #{titanic_forward.1} parent=0 // pred_fallthru
    _
  // Predicated region
  $region10: #{titanic_forward.1} parent=0 // pred_check
    _
  $region11: #{titanic_forward.1} parent=0 // pred_check_branch
    %16 = sbr.rel (0) target = $region13
  $region12: #{titanic_forward.1} parent=0 // pred_region
    _
  $region13: #{titanic_forward.1} parent=0 // pred_fallthru
    _
  // Predicated region
  $region14: #{titanic_forward.1} parent=0 // pred_check
    _
  $region15: #{titanic_forward.1} parent=0 // pred_check_branch
    %18 = sbr.rel (0) target = $region17
  $region16: #{titanic_forward.1} parent=0 // pred_region
    _
  $region17: #{titanic_forward.1} parent=0 // pred_fallthru
    _
  // Predicated region
  $region18: #{titanic_forward.1} parent=0 // pred_check
    _
  $region19: #{titanic_forward.1} parent=0 // pred_check_branch
    %20 = sbr.rel (0) target = $region21
  $region20: #{titanic_forward.1} parent=0 // pred_region
    _
  $region21: #{titanic_forward.1} parent=0 // pred_fallthru
    _
  // Predicated region
  $region22: #{titanic_forward.1} parent=0 // pred_check
    _
  $region23: #{titanic_forward.1} parent=0 // pred_check_branch
    %22 = sbr.rel (0) target = $region25
  $region24: #{titanic_forward.1} parent=0 // pred_region
    _
  $region25: #{titanic_forward.1} parent=0 // pred_fallthru
    _
  %v24 = vld [vmem:[%s0] sm:$0xf]
  %v25 = vld [vmem:[%s1] sm:$0xf]
  %v26 = vld [vmem:[%s1 + $0x4] sm:$0xf]
  %v27 = vld [vmem:[%s1 + $0x8] sm:$0xf]
  %v28 = vld [vmem:[%s1 + $0xc] sm:$0xf]
  %v29 = vld [vmem:[%s2] sm:$0xff]
  %v30 = vld [vmem:[%s2 + $0x8] sm:$0xff]
  %v31 = vld [vmem:[%s2 + $0x10] sm:$0xff]
  %v32 = vld [vmem:[%s2 + $0x18] sm:$0xff]
  %34 = vset.pattern.permute.xlu0 0
  %35 = vperm.xlu0 %34, %v29
  %v36 = vpop.permute.xlu0 %35
  %39 = vset.pattern.permute.xlu0 0
  %40 = vperm.xlu0 %39, %v30
  %v41 = vpop.permute.xlu0 %40
  %44 = vset.pattern.permute.xlu0 0
  %45 = vperm.xlu0 %44, %v31
  %v46 = vpop.permute.xlu0 %45
  %49 = vset.pattern.permute.xlu0 0
  %50 = vperm.xlu0 %49, %v32
  %v51 = vpop.permute.xlu0 %50
  %v57 = vunpack.c.l.b16 %v25
  %v58 = vunpack.c.l.b16 %v26
  %v59 = vunpack.c.l.b16 %v27
  %v60 = vunpack.c.l.b16 %v28
  %v61 = vpack.c.b16 %v58, %v57
  %v62 = vpack.c.b16 %v60, %v59
  %vm63 = vcmask 64512
  %v65 = vsel %vm63, %v61, 0
  %v68 = vsel %vm63, %v62, 0
  %vm70 = vcmask 1043456
  %v72 = vsel %vm70, %v24, 0
  %74 = vmatpush.bf16.msra.mxu0 0
  %75 = vmatpush.bf16.msra.mxu0 0
  %76 = vmatpush.bf16.msra.mxu0 0
  %77 = vmatpush.bf16.msra.mxu0 0
  %78 = vmatpush.bf16.msra.mxu0 0
  %79 = vmatpush.bf16.msra.mxu0 0
  %80 = vmatpush.bf16.msra.mxu0 0
  %81 = vmatpush.bf16.msra.mxu0 %v72
  %82 = vmatmul.bf16.gmra.mxu0 %v65
  %v83 = vpop.f32.mrf.mxu0
  %v84 = vadd.f32 %v36, %v83
  %v85 = vpop.f32.mrf.mxu0
  %v86 = vadd.f32 %v41, %v85
  %87 = vmatmul.bf16.gmra.mxu0 %v68
  %v88 = vpop.f32.mrf.mxu0
  %v89 = vadd.f32 %v46, %v88
  %v90 = vpop.f32.mrf.mxu0
  %v91 = vadd.f32 %v51, %v90
  %92 = vdwg.mxu0
  %vm93 = vcmp.gt.f32.partialorder %v84, 0.0
  %vm94 = vcmp.gt.f32.partialorder %v86, 0.0
  %vm95 = vcmp.gt.f32.partialorder %v89, 0.0
  %vm96 = vcmp.gt.f32.partialorder %v91, 0.0
  %v97 = vmul.f32 %v84, 0.01
  %v98 = vmul.f32 %v86, 0.01
  %v99 = vmul.f32 %v89, 0.01
  %v100 = vmul.f32 %v91, 0.01
  %v101 = vsel %vm93, %v84, %v97
  %v102 = vsel %vm94, %v86, %v98
  %v103 = vsel %vm95, %v89, %v99
  %v104 = vsel %vm96, %v91, %v100
  %v105 = vld [vmem:[%s3] sm:$0xf]
  %v106 = vld [vmem:[%s3 + $0x4] sm:$0xf]
  %v107 = vpack.c.bf16 %v102, %v101
  %v108 = vpack.c.bf16 %v104, %v103
  %v109 = vld [vmem:[%s4] sm:$0xff]
  %v110 = vld [vmem:[%s4 + $0x8] sm:$0xff]
  %112 = vset.pattern.permute.xlu0 0
  %113 = vperm.xlu0 %112, %v109
  %v114 = vpop.permute.xlu0 %113
  %117 = vset.pattern.permute.xlu0 0
  %118 = vperm.xlu0 %117, %v110
  %v119 = vpop.permute.xlu0 %118
  %v123 = vunpack.c.l.b16 %v105
  %v124 = vunpack.c.l.b16 %v106
  %v125 = vpack.c.b16 %v124, %v123
  %vm126 = vcmask 261120
  %v128 = vsel %vm126, %v125, 0
  %130 = vmatpush.bf16.msra.mxu0 0
  %131 = vmatpush.bf16.msra.mxu0 0
  %132 = vmatpush.bf16.msra.mxu0 0
  %133 = vmatpush.bf16.msra.mxu0 0
  %134 = vmatpush.bf16.msra.mxu0 0
  %135 = vmatpush.bf16.msra.mxu0 0
  %136 = vmatpush.bf16.msra.mxu0 %v108
  %137 = vmatpush.bf16.msra.mxu0 %v107
  %138 = vmatmul.bf16.gmra.mxu0 %v128
  %v139 = vpop.f32.mrf.mxu0
  %v140 = vadd.f32 %v114, %v139
  %v141 = vpop.f32.mrf.mxu0
  %v142 = vadd.f32 %v119, %v141
  %143 = vdwg.mxu0
  %vm144 = vcmp.gt.f32.partialorder %v140, 0.0
  %vm145 = vcmp.gt.f32.partialorder %v142, 0.0
  %v146 = vmul.f32 %v140, 0.01
  %v147 = vmul.f32 %v142, 0.01
  %v148 = vsel %vm144, %v140, %v146
  %v149 = vsel %vm145, %v142, %v147
  %v150 = vld [vmem:[%s5] sm:$0xff]
  %v151 = vld [vmem:[%s5 + $0x8] sm:$0xff]
  %153 = vset.pattern.permute.xlu0 0
  %154 = vperm.xlu0 %153, %v150
  %v155 = vpop.permute.xlu0 %154
  %158 = vset.pattern.permute.xlu0 0
  %159 = vperm.xlu0 %158, %v151
  %v160 = vpop.permute.xlu0 %159
  %v162 = vmul.f32 %v148, %v155
  %v163 = vmul.f32 %v149, %v160
  %v164 = vadd.f32 %v162, %v163
  %v165 = vrot.slane %v164, 4
  %v166 = vadd.f32 %v164, %v165
  %v167 = vrot.slane %v166, 2
  %v168 = vadd.f32 %v166, %v167
  %v169 = vrot.slane %v168, 1
  %v170 = vadd.f32 %v168, %v169
  %171 = vst [vmem:[%s6] sm:$0x1] %v170
  // Predicated region
  $region26: #{titanic_forward.1} parent=0 // pred_check
    _
  $region27: #{titanic_forward.1} parent=0 // pred_check_branch
    %173 = sbr.rel (0) target = $region29
  $region28: #{titanic_forward.1} parent=0 // pred_region
    _
  $region29: #{titanic_forward.1} parent=0 // pred_fallthru
    _
  // Predicated region
  $region30: #{titanic_forward.1} parent=0 // pred_check
    _
  $region31: #{titanic_forward.1} parent=0 // pred_check_branch
    %175 = sbr.rel (0) target = $region33
  $region32: #{titanic_forward.1} parent=0 // pred_region
    _
  $region33: #{titanic_forward.1} parent=0 // pred_fallthru
    _

</llo_original>
